<compile_context>
chip_gen: v7x
topology: tpu7x:2x2x1
jax: 0.10.0
libtpu: 0.0.40
codegen_flags: <defaults>
</compile_context>

<pallas_src>
import jax
import jax.numpy as jnp
from jax.experimental import pallas as pl
from jax.experimental.pallas import tpu as pltpu


def _round_up(x, m):
    return (x + m - 1) // m * m


def _make_mlp_kernel(n_sub, sub_tb):
    """Fused 3-layer MLP kernel. The batch tile is split into `n_sub` independent
    row sub-tiles (static Python loop -> fully unrolled) so the LLO scheduler can
    overlap one sub-tile's MXU matmul with another sub-tile's VPU epilogue."""

    def mlp_kernel(x_ref, w1_ref, b1_ref, w2_ref, b2_ref, w3_ref, b3_ref, o_ref):
        for s in range(n_sub):
            rows = pl.ds(s * sub_tb, sub_tb)  # static slice: zero runtime cost

            # Layer 1: cast the f32 x tile to bf16 in-kernel, MXU matmul, f32 accum.
            xs = x_ref[rows, :].astype(w1_ref.dtype)
            h = jnp.dot(xs, w1_ref[...], preferred_element_type=jnp.float32)
            h = jnp.maximum(h + b1_ref[...], 0.0)
            # TODO(synk): training-mode dropout (p=0.4) would use pltpu.prng_seed +
            # pltpu.prng_random_bits for an inverted-dropout mask; eval-mode = identity.

            # Layer 2
            h = jnp.dot(h.astype(w2_ref.dtype), w2_ref[...],
                        preferred_element_type=jnp.float32)
            h = jnp.maximum(h + b2_ref[...], 0.0)

            # Layer 3 (no activation)
            out = jnp.dot(h.astype(w3_ref.dtype), w3_ref[...],
                          preferred_element_type=jnp.float32) + b3_ref[...]
            o_ref[rows, :] = out.astype(o_ref.dtype)

    return mlp_kernel


def prepare_params(params):
    """One-time parameter prep (hoisted out of the forward pass): pad feature dims
    to lane-dense multiples of 128 and cast weights to bf16 (half the HBM/VMEM
    bytes, full-rate MXU). Zero padding is a mathematical no-op for the linears."""
    in_size, hidden = params["w1"].shape
    out_size = params["w3"].shape[1]
    H = _round_up(hidden, 128)
    OUT = _round_up(out_size, 128)

    def pad2(a, r, c, dtype):
        return jnp.zeros((r, c), dtype).at[: a.shape[0], : a.shape[1]].set(
            a.astype(dtype)
        )

    wdt, f32 = jnp.bfloat16, jnp.float32
    return {
        # x stays unpadded along its feature axis, so w1 keeps in_size rows.
        "w1": pad2(params["w1"], in_size, H, wdt),
        "w2": pad2(params["w2"], H, H, wdt),
        "w3": pad2(params["w3"], H, OUT, wdt),
        "b1": pad2(params["b1"], 1, H, f32),
        "b2": pad2(params["b2"], 1, H, f32),
        "b3": pad2(params["b3"], 1, OUT, f32),
    }


def cnn_v0_forward(x, prepped, out_size, *, block_b=512):
    """x: [B, input_size] float32 (unpadded). prepped: output of prepare_params."""
    B, in_size = x.shape
    H = prepped["w1"].shape[1]
    OUT = prepped["w3"].shape[1]
    out_dtype = x.dtype

    # Batch tiling: bound padding waste to <8 rows; force >=2 grid steps when the
    # batch is big enough so the "parallel" axis shards across both v7x TCs.
    n_steps = pl.cdiv(B, block_b)
    if B >= 16 and n_steps < 2:
        n_steps = 2
    TB = _round_up(pl.cdiv(B, n_steps), 8)
    n_steps = pl.cdiv(B, TB)
    Bp = n_steps * TB  # output rows (divisible by TB -> unmasked stores)

    # In-kernel M sub-tiling only pays off on large tiles; 1 sub-tile at tiny B.
    if TB >= 1024:
        n_sub = 4
    elif TB >= 256:
        n_sub = 2
    else:
        n_sub = 1
    sub_tb = TB // n_sub

    # VMEM budget: double-buffered x/out tiles + resident bf16 weights / f32
    # biases + f32 intermediates; capped at 75% of physical VMEM (v7x: 64 MiB).
    try:
        phys_vmem = int(pltpu.get_tpu_info().vmem_capacity_bytes)
    except Exception:
        phys_vmem = 64 << 20
    vmem_need = (
        2 * TB * in_size * 4                     # x tiles (f32, double-buffered)
        + 2 * TB * OUT * 4                       # out tiles (f32, double-buffered)
        + 2 * (in_size * H + H * H + H * OUT) * 2  # resident bf16 weights
        + 2 * (2 * H + OUT) * 4                  # resident f32 biases
        + 3 * sub_tb * H * 4                     # f32 intermediates per sub-tile
    )
    vmem_limit = int(min(max(vmem_need + (4 << 20), 16 << 20),
                         int(0.75 * phys_vmem)))

    # x / out tiled over batch; weights & biases resident via constant index_maps.
    # NOTE(v7x): pipeline_mode=pl.Buffered(1) on the resident specs would drop the
    # unused second buffer; left at default for portability.
    in_specs = [
        # full feature axis in one block -> exempt from the (8,128) rule
        pl.BlockSpec((TB, in_size), lambda i: (i, 0)),
        pl.BlockSpec((in_size, H), lambda i: (0, 0)),
        pl.BlockSpec((1, H), lambda i: (0, 0)),
        pl.BlockSpec((H, H), lambda i: (0, 0)),
        pl.BlockSpec((1, H), lambda i: (0, 0)),
        pl.BlockSpec((H, OUT), lambda i: (0, 0)),
        pl.BlockSpec((1, OUT), lambda i: (0, 0)),
    ]
    out_spec = pl.BlockSpec((TB, OUT), lambda i: (i, 0))

    out_padded = pl.pallas_call(
        _make_mlp_kernel(n_sub, sub_tb),
        out_shape=jax.ShapeDtypeStruct((Bp, OUT), out_dtype),
        grid=(n_steps,),
        in_specs=in_specs,
        out_specs=out_spec,
        compiler_params=pltpu.CompilerParams(
            dimension_semantics=("parallel",),
            vmem_limit_bytes=vmem_limit,
        ),
    )(x, prepped["w1"], prepped["b1"], prepped["w2"], prepped["b2"],
      prepped["w3"], prepped["b3"])

    # Rows beyond B (garbage from partial edge reads) and lane padding are sliced off.
    return out_padded[:B, :out_size]


def init_params(key, input_size, hidden_size, output_size):
    """nn.Linear-style uniform(-1/sqrt(fan_in), 1/sqrt(fan_in)) init.
    Weights stored transposed [in, out]; biases [1, out]."""
    ks = jax.random.split(key, 6)

    def linear(kw, kb, fan_in, fan_out):
        bound = 1.0 / jnp.sqrt(jnp.float32(fan_in))
        w = jax.random.uniform(kw, (fan_in, fan_out), jnp.float32, -bound, bound)
        b = jax.random.uniform(kb, (1, fan_out), jnp.float32, -bound, bound)
        return w, b

    w1, b1 = linear(ks[0], ks[1], input_size, hidden_size)
    w2, b2 = linear(ks[2], ks[3], hidden_size, hidden_size)
    w3, b3 = linear(ks[4], ks[5], hidden_size, output_size)
    return {"w1": w1, "b1": b1, "w2": w2, "b2": b2, "w3": w3, "b3": b3}


def reference_forward(x, params):
    """Pure-JAX reference of the same eval-mode forward with matching bf16
    weight/activation casts and f32 accumulation."""
    wdt = jnp.bfloat16
    h = jnp.dot(x.astype(wdt), params["w1"].astype(wdt),
                preferred_element_type=jnp.float32) + params["b1"]
    h = jnp.maximum(h, 0.0)
    h = jnp.dot(h.astype(wdt), params["w2"].astype(wdt),
                preferred_element_type=jnp.float32) + params["b2"]
    h = jnp.maximum(h, 0.0)
    return jnp.dot(h.astype(wdt), params["w3"].astype(wdt),
                   preferred_element_type=jnp.float32) + params["b3"]


if __name__ == "__main__":
    # NOTE: at these tiny dims (16/32/8, B=2) the kernel is launch/DMA-overhead
    # dominated; the Pallas path pays off at large batch with 128+ feature dims.
    input_size, hidden_size, output_size = 16, 32, 8
    batch = 2

    key = jax.random.PRNGKey(0)
    kx, kp = jax.random.split(key)
    x = jax.random.normal(kx, (batch, input_size), jnp.float32)
    params = init_params(kp, input_size, hidden_size, output_size)

    prepped = prepare_params(params)      # one-time weight prep (reused across calls)
    out = cnn_v0_forward(x, prepped, output_size)
    out = jax.block_until_ready(out)

    ref = reference_forward(x, params)
    assert out.shape == (batch, output_size)
    assert jnp.allclose(out, ref, atol=2e-3, rtol=2e-3)

    print("KERNEL_OK")
</pallas_src>

<mosaic_0001>
module attributes {stable_mosaic.version = 11 : i64} {
  func.func @mlp_kernel(%arg0: i32, %arg1: memref<8x16xf32, #tpu.memory_space<vmem>>, %arg2: memref<16x128xbf16, #tpu.memory_space<vmem>>, %arg3: memref<1x128xf32, #tpu.memory_space<vmem>>, %arg4: memref<128x128xbf16, #tpu.memory_space<vmem>>, %arg5: memref<1x128xf32, #tpu.memory_space<vmem>>, %arg6: memref<128x128xbf16, #tpu.memory_space<vmem>>, %arg7: memref<1x128xf32, #tpu.memory_space<vmem>>, %arg8: memref<8x128xf32, #tpu.memory_space<vmem>>) attributes {dimension_semantics = [#tpu.dimension_semantics<parallel>], iteration_bounds = array<i64: 1>, scalar_prefetch = 0 : i64, scratch_operands = 0 : i64, tpu.core_type = #tpu.core_type<tc>, window_params = [{transform_indices = @transform_0, window_bounds = array<i64: 8, 16>}, {pipeline_mode = #tpu.pipeline_mode<synchronous>, transform_indices = @transform_1, window_bounds = array<i64: 16, 128>}, {pipeline_mode = #tpu.pipeline_mode<synchronous>, transform_indices = @transform_2, window_bounds = array<i64: 1, 128>}, {pipeline_mode = #tpu.pipeline_mode<synchronous>, transform_indices = @transform_3, window_bounds = array<i64: 128, 128>}, {pipeline_mode = #tpu.pipeline_mode<synchronous>, transform_indices = @transform_4, window_bounds = array<i64: 1, 128>}, {pipeline_mode = #tpu.pipeline_mode<synchronous>, transform_indices = @transform_5, window_bounds = array<i64: 128, 128>}, {pipeline_mode = #tpu.pipeline_mode<synchronous>, transform_indices = @transform_6, window_bounds = array<i64: 1, 128>}, {transform_indices = @transform_7, window_bounds = array<i64: 8, 128>}]} {
    %c0 = arith.constant 0 : index
    %c0_0 = arith.constant 0 : index
    %0 = vector.load %arg1[%c0, %c0_0] : memref<8x16xf32, #tpu.memory_space<vmem>>, vector<8x16xf32>
    %1 = arith.truncf %0 : vector<8x16xf32> to vector<8x16xbf16>
    %c0_1 = arith.constant 0 : index
    %c0_2 = arith.constant 0 : index
    %2 = vector.load %arg2[%c0_1, %c0_2] : memref<16x128xbf16, #tpu.memory_space<vmem>>, vector<16x128xbf16>
    %cst = arith.constant dense<0.000000e+00> : vector<8x128xf32>
    %3 = tpu.matmul %1, %2, %cst {dimension_numbers = #tpu.dot_dimension_numbers<[1], [0], [0], [1], [0, 0, 1, 1], [], []>} : vector<8x16xbf16>, vector<16x128xbf16>, vector<8x128xf32> -> vector<8x128xf32>
    %c0_3 = arith.constant 0 : index
    %c0_4 = arith.constant 0 : index
    %4 = vector.load %arg3[%c0_3, %c0_4] : memref<1x128xf32, #tpu.memory_space<vmem>>, vector<1x128xf32>
    %5 = vector.broadcast %4 : vector<1x128xf32> to vector<8x128xf32>
    %6 = arith.addf %3, %5 : vector<8x128xf32>
    %cst_5 = arith.constant 0.000000e+00 : f32
    %7 = vector.broadcast %cst_5 : f32 to vector<8x128xf32>
    %8 = arith.maximumf %6, %7 : vector<8x128xf32>
    %9 = arith.truncf %8 : vector<8x128xf32> to vector<8x128xbf16>
    %c0_6 = arith.constant 0 : index
    %c0_7 = arith.constant 0 : index
    %10 = vector.load %arg4[%c0_6, %c0_7] : memref<128x128xbf16, #tpu.memory_space<vmem>>, vector<128x128xbf16>
    %cst_8 = arith.constant dense<0.000000e+00> : vector<8x128xf32>
    %11 = tpu.matmul %9, %10, %cst_8 {dimension_numbers = #tpu.dot_dimension_numbers<[1], [0], [0], [1], [0, 0, 1, 1], [], []>} : vector<8x128xbf16>, vector<128x128xbf16>, vector<8x128xf32> -> vector<8x128xf32>
    %c0_9 = arith.constant 0 : index
    %c0_10 = arith.constant 0 : index
    %12 = vector.load %arg5[%c0_9, %c0_10] : memref<1x128xf32, #tpu.memory_space<vmem>>, vector<1x128xf32>
    %13 = vector.broadcast %12 : vector<1x128xf32> to vector<8x128xf32>
    %14 = arith.addf %11, %13 : vector<8x128xf32>
    %cst_11 = arith.constant 0.000000e+00 : f32
    %15 = vector.broadcast %cst_11 : f32 to vector<8x128xf32>
    %16 = arith.maximumf %14, %15 : vector<8x128xf32>
    %17 = arith.truncf %16 : vector<8x128xf32> to vector<8x128xbf16>
    %c0_12 = arith.constant 0 : index
    %c0_13 = arith.constant 0 : index
    %18 = vector.load %arg6[%c0_12, %c0_13] : memref<128x128xbf16, #tpu.memory_space<vmem>>, vector<128x128xbf16>
    %cst_14 = arith.constant dense<0.000000e+00> : vector<8x128xf32>
    %19 = tpu.matmul %17, %18, %cst_14 {dimension_numbers = #tpu.dot_dimension_numbers<[1], [0], [0], [1], [0, 0, 1, 1], [], []>} : vector<8x128xbf16>, vector<128x128xbf16>, vector<8x128xf32> -> vector<8x128xf32>
    %c0_15 = arith.constant 0 : index
    %c0_16 = arith.constant 0 : index
    %20 = vector.load %arg7[%c0_15, %c0_16] : memref<1x128xf32, #tpu.memory_space<vmem>>, vector<1x128xf32>
    %21 = vector.broadcast %20 : vector<1x128xf32> to vector<8x128xf32>
    %22 = arith.addf %19, %21 : vector<8x128xf32>
    %c0_17 = arith.constant 0 : index
    %c0_18 = arith.constant 0 : index
    %23 = vector.load %arg8[%c0_17, %c0_18] : memref<8x128xf32, #tpu.memory_space<vmem>>, vector<8x128xf32>
    tpu.vector_store %arg8[%c0_17, %c0_18], %22 {strides = array<i32>} : memref<8x128xf32, #tpu.memory_space<vmem>>, vector<8x128xf32>,
    return
  }
  func.func @transform_0(%arg0: i32) -> (i32, i32) {
    %c0_i32 = arith.constant 0 : i32
    %c0_i32_0 = arith.constant 0 : i32
    return %arg0, %c0_i32 : i32, i32
  }
  func.func @transform_1(%arg0: i32) -> (i32, i32) {
    %c0_i32 = arith.constant 0 : i32
    %c0_i32_0 = arith.constant 0 : i32
    %c0_i32_1 = arith.constant 0 : i32
    return %c0_i32, %c0_i32_0 : i32, i32
  }
  func.func @transform_2(%arg0: i32) -> (i32, i32) {
    %c0_i32 = arith.constant 0 : i32
    %c0_i32_0 = arith.constant 0 : i32
    %c0_i32_1 = arith.constant 0 : i32
    return %c0_i32, %c0_i32_0 : i32, i32
  }
  func.func @transform_3(%arg0: i32) -> (i32, i32) {
    %c0_i32 = arith.constant 0 : i32
    %c0_i32_0 = arith.constant 0 : i32
    %c0_i32_1 = arith.constant 0 : i32
    return %c0_i32, %c0_i32_0 : i32, i32
  }
  func.func @transform_4(%arg0: i32) -> (i32, i32) {
    %c0_i32 = arith.constant 0 : i32
    %c0_i32_0 = arith.constant 0 : i32
    %c0_i32_1 = arith.constant 0 : i32
    return %c0_i32, %c0_i32_0 : i32, i32
  }
  func.func @transform_5(%arg0: i32) -> (i32, i32) {
    %c0_i32 = arith.constant 0 : i32
    %c0_i32_0 = arith.constant 0 : i32
    %c0_i32_1 = arith.constant 0 : i32
    return %c0_i32, %c0_i32_0 : i32, i32
  }
  func.func @transform_6(%arg0: i32) -> (i32, i32) {
    %c0_i32 = arith.constant 0 : i32
    %c0_i32_0 = arith.constant 0 : i32
    %c0_i32_1 = arith.constant 0 : i32
    return %c0_i32, %c0_i32_0 : i32, i32
  }
  func.func @transform_7(%arg0: i32) -> (i32, i32) {
    %c0_i32 = arith.constant 0 : i32
    %c0_i32_0 = arith.constant 0 : i32
    return %arg0, %c0_i32 : i32, i32
  }
}

</mosaic_0001>

<llo_original>
// kernel: tpu_custom_call.1
$region0: #{tpu_custom_call.1}
  #allocation0 [shape = 'u32[]', space=smem, size = 0x4, offset = 0x4, fixed_abs, tag = 'smem constant byte address 0x4 - core index']
  #allocation1 [shape = 'u32[144,128]{1,0:T(1,128)}', space=vmem, size = 0x12000, scoped, tag = 'internal scratch']
  %s0 = inlined_call_operand.hbm [shape: f32[2,16], index: 0, kind: input, shape index: {}]
  %s1 = inlined_call_operand.hbm [shape: bf16[16,128], index: 1, kind: input, shape index: {}]
  %s2 = inlined_call_operand.vmem [shape: f32[1,128], index: 2, kind: input, shape index: {}]
  %s3 = inlined_call_operand.hbm [shape: bf16[128,128], index: 3, kind: input, shape index: {}]
  %s4 = inlined_call_operand.vmem [shape: f32[1,128], index: 4, kind: input, shape index: {}]
  %s5 = inlined_call_operand.hbm [shape: bf16[128,128], index: 5, kind: input, shape index: {}]
  %s6 = inlined_call_operand.vmem [shape: f32[1,128], index: 6, kind: input, shape index: {}]
  %s7 = inlined_call_operand.hbm [shape: f32[8,128], index: 7, kind: output, shape index: {}]
  %s8 = sld [smem:[#allocation0]]
  $region54: #{tpu_custom_call.1} parent=0
    _
  %s10 = ssub.s32 1, %s8
  %s11 = scalar_select 0, %s10, %s8
  $region1: #{tpu_custom_call.1} parent=0
    #allocation2 [shape = 'u8[4096]{0}', space=vmem, size = 0x1000, scoped, tag = 'input window, operand 0, single buffered']
    #allocation3 [shape = 's32[1]{0}', space=sflag, size = 0x4, scoped, tag = 'scoped memory for tpu_custom_call.1']
    #allocation4 [shape = 's32[1]{0}', space=sflag, size = 0x4, scoped, tag = 'scoped memory for tpu_custom_call.1']
    #allocation5 [shape = 'u8[4096]{0}', space=vmem, size = 0x1000, scoped, tag = 'input window, operand 1, single buffered']
    #allocation6 [shape = 's32[1]{0}', space=sflag, size = 0x4, scoped, tag = 'scoped memory for tpu_custom_call.1']
    #allocation7 [shape = 'u8[32768]{0}', space=vmem, size = 0x8000, scoped, tag = 'input window, operand 3, single buffered']
    #allocation8 [shape = 'u8[32768]{0}', space=vmem, size = 0x8000, scoped, tag = 'input window, operand 5, single buffered']
    #allocation9 [shape = 's32[1]{0}', space=sflag, size = 0x4, scoped, tag = 'scoped memory for tpu_custom_call.1']
    #allocation10 [shape = 'u8[4096]{0}', space=vmem, size = 0x1000, scoped, tag = 'output window, operand 0, single buffered']
    %12 = vsyncpa [#allocation3], 0
    %13 = vsyncpa [#allocation6], 0
    %14 = vsyncpa [#allocation9], 0
    %15 = vsyncpa [#allocation4], 0
    // Predicated region
    $region2: #{tpu_custom_call.1} parent=1 // pred_check
      _
    $region3: #{tpu_custom_call.1} parent=1 // pred_check_branch
      %17 = sbr.rel (0) target = $region5
    $region4: #{tpu_custom_call.1} parent=1 // pred_region
      %s19 = ssub.s32 128, 32
      %20 = vsyncadd [#allocation3], %s19
      %s21 = sshll.u32 [#allocation2], 4
      %s22 = int_to_ptr.vmem [resolvable:$true] %s21
      %27 = dma.hbm_to_vmem [thread:$0]  %s0, 32, %s22, [#allocation3], 32, 32, 2
    $region5: #{tpu_custom_call.1} parent=1 // pred_fallthru
      _
    // Predicated region
    $region6: #{tpu_custom_call.1} parent=1 // pred_check
      _
    $region7: #{tpu_custom_call.1} parent=1 // pred_check_branch
      %29 = sbr.rel (0) target = $region9
    $region8: #{tpu_custom_call.1} parent=1 // pred_region
      %s31 = ssub.s32 128, 128
      %32 = vsyncadd [#allocation6], %s31
      %s33 = sshll.u32 [#allocation5], 4
      %s34 = int_to_ptr.vmem [resolvable:$true] %s33
      %39 = dma.hbm_to_vmem [thread:$0]  %s1, 128, %s34, [#allocation6], 64, 64, 4
    $region9: #{tpu_custom_call.1} parent=1 // pred_fallthru
      _
    // Predicated region
    $region10: #{tpu_custom_call.1} parent=1 // pred_check
      _
    $region11: #{tpu_custom_call.1} parent=1 // pred_check_branch
      %41 = sbr.rel (0) target = $region13
    $region12: #{tpu_custom_call.1} parent=1 // pred_region
      _
    $region13: #{tpu_custom_call.1} parent=1 // pred_fallthru
      _
    // Predicated region
    $region14: #{tpu_custom_call.1} parent=1 // pred_check
      _
    $region15: #{tpu_custom_call.1} parent=1 // pred_check_branch
      %43 = sbr.rel (0) target = $region17
    $region16: #{tpu_custom_call.1} parent=1 // pred_region
      %s45 = ssub.s32 1024, 1024
      %46 = vsyncadd [#allocation6], %s45
      %s47 = sshll.u32 [#allocation7], 4
      %s48 = int_to_ptr.vmem [resolvable:$true] %s47
      %53 = dma.hbm_to_vmem [thread:$0]  %s3, 1024, %s48, [#allocation6], 64, 64, 4
    $region17: #{tpu_custom_call.1} parent=1 // pred_fallthru
      _
    // Predicated region
    $region18: #{tpu_custom_call.1} parent=1 // pred_check
      _
    $region19: #{tpu_custom_call.1} parent=1 // pred_check_branch
      %55 = sbr.rel (0) target = $region21
    $region20: #{tpu_custom_call.1} parent=1 // pred_region
      _
    $region21: #{tpu_custom_call.1} parent=1 // pred_fallthru
      _
    // Predicated region
    $region22: #{tpu_custom_call.1} parent=1 // pred_check
      _
    $region23: #{tpu_custom_call.1} parent=1 // pred_check_branch
      %57 = sbr.rel (0) target = $region25
    $region24: #{tpu_custom_call.1} parent=1 // pred_region
      %s59 = ssub.s32 1024, 1024
      %60 = vsyncadd [#allocation9], %s59
      %s61 = sshll.u32 [#allocation8], 4
      %s62 = int_to_ptr.vmem [resolvable:$true] %s61
      %67 = dma.hbm_to_vmem [thread:$0]  %s5, 1024, %s62, [#allocation9], 64, 64, 4
    $region25: #{tpu_custom_call.1} parent=1 // pred_fallthru
      _
    // Predicated region
    $region26: #{tpu_custom_call.1} parent=1 // pred_check
      _
    $region27: #{tpu_custom_call.1} parent=1 // pred_check_branch
      %69 = sbr.rel (0) target = $region29
    $region28: #{tpu_custom_call.1} parent=1 // pred_region
      _
    $region29: #{tpu_custom_call.1} parent=1 // pred_fallthru
      _
    // Predicated region
    $region30: #{tpu_custom_call.1} parent=1 // pred_check
      _
    $region31: #{tpu_custom_call.1} parent=1 // pred_check_branch
      %71 = sbr.rel (0) target = $region33
    $region32: #{tpu_custom_call.1} parent=1 // pred_region
      %72 = dma.done [#allocation3], 128
    $region33: #{tpu_custom_call.1} parent=1 // pred_fallthru
      _
    // Predicated region
    $region34: #{tpu_custom_call.1} parent=1 // pred_check
      _
    $region35: #{tpu_custom_call.1} parent=1 // pred_check_branch
      %74 = sbr.rel (0) target = $region37
    $region36: #{tpu_custom_call.1} parent=1 // pred_region
      %75 = dma.done [#allocation6], 128
    $region37: #{tpu_custom_call.1} parent=1 // pred_fallthru
      _
    // Predicated region
    $region38: #{tpu_custom_call.1} parent=1 // pred_check
      _
    $region39: #{tpu_custom_call.1} parent=1 // pred_check_branch
      %77 = sbr.rel (0) target = $region41
    $region40: #{tpu_custom_call.1} parent=1 // pred_region
      %78 = dma.done [#allocation6], 1024
    $region41: #{tpu_custom_call.1} parent=1 // pred_fallthru
      _
    // Predicated region
    $region42: #{tpu_custom_call.1} parent=1 // pred_check
      _
    $region43: #{tpu_custom_call.1} parent=1 // pred_check_branch
      %80 = sbr.rel (0) target = $region45
    $region44: #{tpu_custom_call.1} parent=1 // pred_region
      %81 = dma.done [#allocation9], 1024
    $region45: #{tpu_custom_call.1} parent=1 // pred_fallthru
      _
    %v83 = vld [vmem:[#allocation2] sm:$0xff]
    %v84 = vpack.c.bf16 %v83, %v83
    %v85 = vld [vmem:[#allocation5] sm:$0xf]
    %v86 = vld [vmem:[#allocation5 + $0x4] sm:$0xf]
    %v87 = vld [vmem:[%s2] sm:$0x1]
    %v89 = vlaneseq
    %v90 = vshrl.u32 %v89, 7
    %v91 = vsub.s32 0, %v90
    %v92 = vrot.slane %v87, %v91
    %v96 = vunpack.c.l.b16 %v85
    %v97 = vunpack.c.l.b16 %v86
    %v98 = vpack.c.b16 %v97, %v96
    %vm100 = vcmask 130048
    %v102 = vsel %vm100, %v84, 0
    %104 = vmatprep.subr.bf16.mxu0 0
    %105 = vmatpush1.bf16.msra.mxu0 %v98
    %106 = vmatprep.subr.bf16.mxu0 0
    %107 = vmatpush1.bf16.msra.mxu0 0
    %108 = vmatprep.subr.bf16.mxu0 0
    %109 = vmatpush1.bf16.msra.mxu0 0
    %110 = vmatprep.subr.bf16.mxu0 0
    %111 = vmatpush1.bf16.msra.mxu0 0
    %112 = vmatprep.subr.bf16.mxu0 0
    %113 = vmatpush1.bf16.msra.mxu0 0
    %114 = vmatprep.subr.bf16.mxu0 0
    %115 = vmatpush1.bf16.msra.mxu0 0
    %116 = vmatprep.subr.bf16.mxu0 0
    %117 = vmatpush1.bf16.msra.mxu0 0
    %118 = vmatprep.subr.bf16.mxu0 0
    %119 = vmatpush1.bf16.msra.mxu0 0
    %120 = vmatprep.subr.bf16.mxu0 0
    %121 = vmatpush1.bf16.msra.mxu0 0
    %122 = vmatprep.subr.bf16.mxu0 0
    %123 = vmatpush1.bf16.msra.mxu0 0
    %124 = vmatprep.subr.bf16.mxu0 0
    %125 = vmatpush1.bf16.msra.mxu0 0
    %126 = vmatprep.subr.bf16.mxu0 0
    %127 = vmatpush1.bf16.msra.mxu0 0
    %128 = vmatprep.subr.bf16.mxu0 0
    %129 = vmatpush1.bf16.msra.mxu0 0
    %130 = vmatprep.subr.bf16.mxu0 0
    %131 = vmatpush1.bf16.msra.mxu0 0
    %132 = vmatprep.subr.bf16.mxu0 0
    %133 = vmatpush1.bf16.msra.mxu0 0
    %134 = vmatprep.subr.bf16.mxu0 0
    %135 = vmatpush1.bf16.msra.mxu0 0
    %136 = vmatprep.mubr.bf16.mxu0 0
    %137 = vmatmul.mubr.bf16.gmra.mrb[0].mxu0 %v102
    %v138 = vpop.f32.mrb[0].mxu0
    %v139 = vadd.f32 %v92, %v138
    %v140 = vpop.f32.mrb[0].mxu0
    %v141 = vpop.f32.mrb[0].mxu0
    %v142 = vpop.f32.mrb[0].mxu0
    %143 = vdwg.mxu0
    %v144 = vmax.f32 %v139, 0.0
    %v145 = vpack.c.bf16 %v144, %v144
    %v146 = vld [vmem:[#allocation7] sm:$0xf]
    %v147 = vld [vmem:[#allocation7 + $0x4] sm:$0xf]
    %v148 = vld [vmem:[#allocation7 + $0x8] sm:$0xf]
    %v149 = vld [vmem:[#allocation7 + $0xc] sm:$0xf]
    %v150 = vld [vmem:[#allocation7 + $0x10] sm:$0xf]
    %v151 = vld [vmem:[#allocation7 + $0x14] sm:$0xf]
    %v152 = vld [vmem:[#allocation7 + $0x18] sm:$0xf]
    %v153 = vld [vmem:[#allocation7 + $0x1c] sm:$0xf]
    %v154 = vld [vmem:[#allocation7 + $0x20] sm:$0xf]
    %v155 = vld [vmem:[#allocation7 + $0x24] sm:$0xf]
    %v156 = vld [vmem:[#allocation7 + $0x28] sm:$0xf]
    %v157 = vld [vmem:[#allocation7 + $0x2c] sm:$0xf]
    %v158 = vld [vmem:[#allocation7 + $0x30] sm:$0xf]
    %v159 = vld [vmem:[#allocation7 + $0x34] sm:$0xf]
    %v160 = vld [vmem:[#allocation7 + $0x38] sm:$0xf]
    %v161 = vld [vmem:[#allocation7 + $0x3c] sm:$0xf]
    %v162 = vld [vmem:[%s4] sm:$0x1]
    %v164 = vlaneseq
    %v165 = vshrl.u32 %v164, 7
    %v166 = vsub.s32 0, %v165
    %v167 = vrot.slane %v162, %v166
    %v185 = vunpack.c.l.b16 %v146
    %v186 = vunpack.c.l.b16 %v147
    %v187 = vunpack.c.l.b16 %v148
    %v188 = vunpack.c.l.b16 %v149
    %v189 = vunpack.c.l.b16 %v150
    %v190 = vunpack.c.l.b16 %v151
    %v191 = vunpack.c.l.b16 %v152
    %v192 = vunpack.c.l.b16 %v153
    %v193 = vunpack.c.l.b16 %v154
    %v194 = vunpack.c.l.b16 %v155
    %v195 = vunpack.c.l.b16 %v156
    %v196 = vunpack.c.l.b16 %v157
    %v197 = vunpack.c.l.b16 %v158
    %v198 = vunpack.c.l.b16 %v159
    %v199 = vunpack.c.l.b16 %v160
    %v200 = vunpack.c.l.b16 %v161
    %v201 = vpack.c.b16 %v186, %v185
    %v202 = vpack.c.b16 %v188, %v187
    %v203 = vpack.c.b16 %v190, %v189
    %v204 = vpack.c.b16 %v192, %v191
    %v205 = vpack.c.b16 %v194, %v193
    %v206 = vpack.c.b16 %v196, %v195
    %v207 = vpack.c.b16 %v198, %v197
    %v208 = vpack.c.b16 %v200, %v199
    %217 = vmatprep.subr.bf16.mxu0 0
    %218 = vmatpush1.bf16.msra.mxu0 %v201
    %219 = vmatprep.subr.bf16.mxu0 0
    %220 = vmatpush1.bf16.msra.mxu0 %v202
    %221 = vmatprep.subr.bf16.mxu0 0
    %222 = vmatpush1.bf16.msra.mxu0 %v203
    %223 = vmatprep.subr.bf16.mxu0 0
    %224 = vmatpush1.bf16.msra.mxu0 %v204
    %225 = vmatprep.subr.bf16.mxu0 0
    %226 = vmatpush1.bf16.msra.mxu0 %v205
    %227 = vmatprep.subr.bf16.mxu0 0
    %228 = vmatpush1.bf16.msra.mxu0 %v206
    %229 = vmatprep.subr.bf16.mxu0 0
    %230 = vmatpush1.bf16.msra.mxu0 %v207
    %231 = vmatprep.subr.bf16.mxu0 0
    %232 = vmatpush1.bf16.msra.mxu0 %v208
    %233 = vmatprep.subr.bf16.mxu0 0
    %234 = vmatpush1.bf16.msra.mxu0 0
    %235 = vmatprep.subr.bf16.mxu0 0
    %236 = vmatpush1.bf16.msra.mxu0 0
    %237 = vmatprep.subr.bf16.mxu0 0
    %238 = vmatpush1.bf16.msra.mxu0 0
    %239 = vmatprep.subr.bf16.mxu0 0
    %240 = vmatpush1.bf16.msra.mxu0 0
    %241 = vmatprep.subr.bf16.mxu0 0
    %242 = vmatpush1.bf16.msra.mxu0 0
    %243 = vmatprep.subr.bf16.mxu0 0
    %244 = vmatpush1.bf16.msra.mxu0 0
    %245 = vmatprep.subr.bf16.mxu0 0
    %246 = vmatpush1.bf16.msra.mxu0 0
    %247 = vmatprep.subr.bf16.mxu0 0
    %248 = vmatpush1.bf16.msra.mxu0 0
    %249 = vmatprep.mubr.bf16.mxu0 0
    %250 = vmatmul.mubr.bf16.gmra.mrb[0].mxu0 %v145
    %v251 = vpop.f32.mrb[0].mxu0
    %v252 = vadd.f32 %v167, %v251
    %v253 = vpop.f32.mrb[0].mxu0
    %v254 = vpop.f32.mrb[0].mxu0
    %v255 = vpop.f32.mrb[0].mxu0
    %256 = vdwg.mxu0
    %v257 = vmax.f32 %v252, 0.0
    %v258 = vpack.c.bf16 %v257, %v257
    %v259 = vld [vmem:[#allocation8] sm:$0xf]
    %v260 = vld [vmem:[#allocation8 + $0x4] sm:$0xf]
    %v261 = vld [vmem:[#allocation8 + $0x8] sm:$0xf]
    %v262 = vld [vmem:[#allocation8 + $0xc] sm:$0xf]
    %v263 = vld [vmem:[#allocation8 + $0x10] sm:$0xf]
    %v264 = vld [vmem:[#allocation8 + $0x14] sm:$0xf]
    %v265 = vld [vmem:[#allocation8 + $0x18] sm:$0xf]
    %v266 = vld [vmem:[#allocation8 + $0x1c] sm:$0xf]
    %v267 = vld [vmem:[#allocation8 + $0x20] sm:$0xf]
    %v268 = vld [vmem:[#allocation8 + $0x24] sm:$0xf]
    %v269 = vld [vmem:[#allocation8 + $0x28] sm:$0xf]
    %v270 = vld [vmem:[#allocation8 + $0x2c] sm:$0xf]
    %v271 = vld [vmem:[#allocation8 + $0x30] sm:$0xf]
    %v272 = vld [vmem:[#allocation8 + $0x34] sm:$0xf]
    %v273 = vld [vmem:[#allocation8 + $0x38] sm:$0xf]
    %v274 = vld [vmem:[#allocation8 + $0x3c] sm:$0xf]
    %v275 = vld [vmem:[%s6] sm:$0x1]
    %v277 = vlaneseq
    %v278 = vshrl.u32 %v277, 7
    %v279 = vsub.s32 0, %v278
    %v280 = vrot.slane %v275, %v279
    %v298 = vunpack.c.l.b16 %v259
    %v299 = vunpack.c.l.b16 %v260
    %v300 = vunpack.c.l.b16 %v261
    %v301 = vunpack.c.l.b16 %v262
    %v302 = vunpack.c.l.b16 %v263
    %v303 = vunpack.c.l.b16 %v264
    %v304 = vunpack.c.l.b16 %v265
    %v305 = vunpack.c.l.b16 %v266
    %v306 = vunpack.c.l.b16 %v267
    %v307 = vunpack.c.l.b16 %v268
    %v308 = vunpack.c.l.b16 %v269
    %v309 = vunpack.c.l.b16 %v270
    %v310 = vunpack.c.l.b16 %v271
    %v311 = vunpack.c.l.b16 %v272
    %v312 = vunpack.c.l.b16 %v273
    %v313 = vunpack.c.l.b16 %v274
    %v314 = vpack.c.b16 %v299, %v298
    %v315 = vpack.c.b16 %v301, %v300
    %v316 = vpack.c.b16 %v303, %v302
    %v317 = vpack.c.b16 %v305, %v304
    %v318 = vpack.c.b16 %v307, %v306
    %v319 = vpack.c.b16 %v309, %v308
    %v320 = vpack.c.b16 %v311, %v310
    %v321 = vpack.c.b16 %v313, %v312
    %330 = vmatprep.subr.bf16.mxu0 0
    %331 = vmatpush1.bf16.msra.mxu0 %v314
    %332 = vmatprep.subr.bf16.mxu0 0
    %333 = vmatpush1.bf16.msra.mxu0 %v315
    %334 = vmatprep.subr.bf16.mxu0 0
    %335 = vmatpush1.bf16.msra.mxu0 %v316
    %336 = vmatprep.subr.bf16.mxu0 0
    %337 = vmatpush1.bf16.msra.mxu0 %v317
    %338 = vmatprep.subr.bf16.mxu0 0
    %339 = vmatpush1.bf16.msra.mxu0 %v318
    %340 = vmatprep.subr.bf16.mxu0 0
    %341 = vmatpush1.bf16.msra.mxu0 %v319
    %342 = vmatprep.subr.bf16.mxu0 0
    %343 = vmatpush1.bf16.msra.mxu0 %v320
    %344 = vmatprep.subr.bf16.mxu0 0
    %345 = vmatpush1.bf16.msra.mxu0 %v321
    %346 = vmatprep.subr.bf16.mxu0 0
    %347 = vmatpush1.bf16.msra.mxu0 0
    %348 = vmatprep.subr.bf16.mxu0 0
    %349 = vmatpush1.bf16.msra.mxu0 0
    %350 = vmatprep.subr.bf16.mxu0 0
    %351 = vmatpush1.bf16.msra.mxu0 0
    %352 = vmatprep.subr.bf16.mxu0 0
    %353 = vmatpush1.bf16.msra.mxu0 0
    %354 = vmatprep.subr.bf16.mxu0 0
    %355 = vmatpush1.bf16.msra.mxu0 0
    %356 = vmatprep.subr.bf16.mxu0 0
    %357 = vmatpush1.bf16.msra.mxu0 0
    %358 = vmatprep.subr.bf16.mxu0 0
    %359 = vmatpush1.bf16.msra.mxu0 0
    %360 = vmatprep.subr.bf16.mxu0 0
    %361 = vmatpush1.bf16.msra.mxu0 0
    %362 = vmatprep.mubr.bf16.mxu0 0
    %363 = vmatmul.mubr.bf16.gmra.mrb[0].mxu0 %v258
    %v364 = vpop.f32.mrb[0].mxu0
    %v365 = vadd.f32 %v280, %v364
    %v366 = vpop.f32.mrb[0].mxu0
    %v367 = vpop.f32.mrb[0].mxu0
    %v368 = vpop.f32.mrb[0].mxu0
    %369 = vdwg.mxu0
    %370 = vst [vmem:[#allocation10] sm:$0xff] %v365
    // Predicated region
    $region46: #{tpu_custom_call.1} parent=1 // pred_check
      _
    $region47: #{tpu_custom_call.1} parent=1 // pred_check_branch
      %372 = sbr.rel (0) target = $region49
    $region48: #{tpu_custom_call.1} parent=1 // pred_region
      %s374 = ssub.s32 128, 128
      %375 = vsyncadd [#allocation4], %s374
      %s377 = sshll.u32 [#allocation10], 4
      %s378 = int_to_ptr.vmem [resolvable:$true] %s377
      %380 = dma.vmem_to_hbm [thread:$0]  %s378, 128, %s7, [#allocation4]
    $region49: #{tpu_custom_call.1} parent=1 // pred_fallthru
      _
    // Predicated region
    $region50: #{tpu_custom_call.1} parent=1 // pred_check
      _
    $region51: #{tpu_custom_call.1} parent=1 // pred_check_branch
      %382 = sbr.rel (0) target = $region53
    $region52: #{tpu_custom_call.1} parent=1 // pred_region
      %383 = dma.done [#allocation4], 128
    $region53: #{tpu_custom_call.1} parent=1 // pred_fallthru
      _
    %384 = vsyncpa [#allocation3], 1
    %385 = vsyncpa [#allocation6], 1
    %386 = vsyncpa [#allocation9], 1
    %387 = vsyncpa [#allocation4], 1

</llo_original>
